<compile_context>
chip_gen: v5e
topology: v5e:2x2
jax: 0.10.0
libtpu: 0.0.40
codegen_flags: <defaults>
</compile_context>

<pallas_src>
import functools

import jax
import jax.numpy as jnp
from jax import lax
from jax.experimental import pallas as pl
from jax.experimental.pallas import tpu as pltpu

_LANE = 128
_VMEM_LIMIT = 32 * 1024 * 1024   # fits v7x (64 MiB/TC) as well as v5e/v6e


def _round_up(x, m):
    return (x + m - 1) // m * m


# ----------------------------- architecture tables ----------------------------

_FEATURES = [
    dict(kind="conv", name="conv1", cin=3, cout=64, k=11, stride=4, pad=2),
    dict(kind="relu"),
    dict(kind="pool", k=3, stride=2),
    dict(kind="conv", name="conv2", cin=64, cout=192, k=5, stride=1, pad=2),
    dict(kind="relu"),
    dict(kind="pool", k=3, stride=2),
    dict(kind="conv", name="conv3", cin=192, cout=384, k=3, stride=1, pad=1),
    dict(kind="relu"),
    dict(kind="conv", name="conv4", cin=384, cout=256, k=3, stride=1, pad=1),
    dict(kind="relu"),
    dict(kind="conv", name="conv5", cin=256, cout=256, k=3, stride=1, pad=1),
    dict(kind="relu"),
    dict(kind="pool", k=3, stride=2),
]
_CONV_MAP = {op["name"]: i for i, op in enumerate(_FEATURES) if op["kind"] == "conv"}

_CLASSIFIER = [
    dict(kind="dropout"),
    dict(kind="linear", name="fc6", cin=256 * 6 * 6, cout=4096),
    dict(kind="relu"),
    dict(kind="dropout"),
    dict(kind="linear", name="fc7", cin=4096, cout=4096),
    dict(kind="relu"),
    dict(kind="linear", name="fc8", cin=4096, cout=1000),
]
_CLASSIFIER_MAP = {"fc6": 1, "relu6": 2, "fc7": 4, "relu7": 5, "fc8": 6}

SUPPORTED_LAYERS = ["conv1", "conv2", "conv3", "conv4", "conv5",
                    "fc6", "relu6", "fc7", "fc8"]


def _truncated_ops(output_layer):
    assert output_layer in SUPPORTED_LAYERS, output_layer
    if "conv" in output_layer:
        return _FEATURES[: _CONV_MAP[output_layer] + 1], []
    return list(_FEATURES), _CLASSIFIER[: _CLASSIFIER_MAP[output_layer] + 1]


# ------------------------------- Pallas kernels --------------------------------

def _linear_kernel(x_ref, w_ref, b_ref, o_ref, acc_ref, *, relu):
    """Tiled matmul with K-reduction grid axis, fused bias (+ReLU) epilogue."""
    @pl.when(pl.program_id(2) == 0)
    def _():
        acc_ref[...] = jnp.zeros_like(acc_ref)

    acc_ref[...] += jnp.dot(x_ref[...], w_ref[...],
                            preferred_element_type=jnp.float32)

    @pl.when(pl.program_id(2) == pl.num_programs(2) - 1)
    def _():
        y = acc_ref[...] + b_ref[...]
        if relu:
            y = jnp.maximum(y, 0.0)
        o_ref[...] = y.astype(o_ref.dtype)


def _conv_s1_kernel(x_ref, w_ref, b_ref, o_ref, *, K, Ho, Wop, tile_h, relu):
    """Fused KxK stride-1 conv + bias (+ReLU), one image x one cout tile per grid step.

    x_ref: (1, Hp, Wp, Cin)       spatially padded input (bf16, real channel count)
    w_ref: (K*K, Cin, co_tile)    per-tap weight matrices (bf16, prepacked)
    b_ref: (1, co_tile)           bias (f32)
    o_ref: (1, Ho*Wop, co_tile)   flattened lane-dense output slab

    Output rows are tiled in-kernel so the f32 accumulator for each row tile stays in
    vector registers (no VMEM read-modify-write across taps).
    """
    cin = x_ref.shape[-1]
    co = w_ref.shape[-1]
    bias = b_ref[...]                                   # (1, co) f32
    for r0 in range(0, Ho, tile_h):
        th = min(tile_h, Ho - r0)
        acc = jnp.zeros((th * Wop, co), jnp.float32)
        for kh in range(K):
            for kw in range(K):
                patch = x_ref[0, r0 + kh:r0 + kh + th, kw:kw + Wop, :]
                acc = acc + jnp.dot(patch.reshape(th * Wop, cin),
                                    w_ref[kh * K + kw],
                                    preferred_element_type=jnp.float32)
        y = acc + bias
        if relu:
            y = jnp.maximum(y, 0.0)
        o_ref[0, r0 * Wop:(r0 + th) * Wop, :] = y.astype(o_ref.dtype)


def _maxpool_kernel(x_ref, o_ref, *, K, s, Ho, Wo):
    out = None
    for kh in range(K):
        dh, ph = kh // s, kh % s
        for kw in range(K):
            dw, pw = kw // s, kw % s
            v = x_ref[0, ph * s + pw, dh:dh + Ho, dw:dw + Wo, :]
            out = v if out is None else jnp.maximum(out, v)
    o_ref[...] = out.reshape(o_ref.shape)


# ------------------------------- parameter packing ------------------------------
# All weight transpose / pad / cast happens here ONCE, not per forward call.

def _pack_matmul(w_in_out, b):
    """w_in_out: (K, N) f32, b: (N,) -> padded bf16 weight + f32 bias, ready for MXU."""
    k_in, n_out = w_in_out.shape
    k_pad = _round_up(k_in, _LANE)
    n_pad = _round_up(n_out, _LANE)
    wp = jnp.zeros((k_pad, n_pad), jnp.float32).at[:k_in, :n_out].set(
        w_in_out.astype(jnp.float32))
    bp = jnp.zeros((1, n_pad), jnp.float32).at[0, :n_out].set(b.astype(jnp.float32))
    return dict(w=wp.astype(jnp.bfloat16), b=bp, n_out=n_out, k_in=k_in)


def pack_params(raw_params):
    """Prepack conv (and, if present, fc) weights for the Pallas kernels."""
    packed = {}
    for op in _FEATURES:
        if op["kind"] != "conv" or op["name"] not in raw_params:
            continue
        name, k, cin, cout = op["name"], op["k"], op["cin"], op["cout"]
        w_hwio = jnp.transpose(raw_params[name]["w"], (2, 3, 1, 0))      # OIHW -> HWIO
        b = raw_params[name]["b"]
        if op["stride"] > 1:
            # conv1: fold all taps into the matmul K dimension (K = k*k*cin).
            packed[name] = _pack_matmul(w_hwio.reshape(k * k * cin, cout), b)
        else:
            packed[name] = dict(
                w=w_hwio.reshape(k * k, cin, cout).astype(jnp.bfloat16),
                b=b.reshape(1, cout).astype(jnp.float32))
    for op in _CLASSIFIER:
        if op["kind"] != "linear" or op["name"] not in raw_params:
            continue
        packed[op["name"]] = _pack_matmul(
            jnp.transpose(raw_params[op["name"]]["w"]), raw_params[op["name"]]["b"])
    return packed


# -------------------------------- op wrappers ----------------------------------

def linear_pallas(x, pw, relu=False, out_dtype=jnp.float32):
    """y = x @ W + b (optional ReLU) using a prepacked weight dict from _pack_matmul."""
    w, b, n_out, k_in = pw["w"], pw["b"], pw["n_out"], pw["k_in"]
    m, k = x.shape
    assert k == k_in, (k, k_in)
    k_pad, n_pad = w.shape
    tile_n = next(t for t in (512, 256, 128) if n_pad % t == 0)
    tile_k = next(t for t in (2048, 1024, 512, 256, 128) if k_pad % t == 0)
    tile_m = min(256, _round_up(m, 8))
    m_pad = _round_up(m, tile_m)

    xp = jnp.zeros((m_pad, k_pad), jnp.bfloat16).at[:m, :k].set(x.astype(jnp.bfloat16))

    out = pl.pallas_call(
        functools.partial(_linear_kernel, relu=relu),
        out_shape=jax.ShapeDtypeStruct((m_pad, n_pad), out_dtype),
        grid=(m_pad // tile_m, n_pad // tile_n, k_pad // tile_k),
        in_specs=[
            pl.BlockSpec((tile_m, tile_k), lambda i, j, kk: (i, kk)),
            pl.BlockSpec((tile_k, tile_n), lambda i, j, kk: (kk, j)),
            pl.BlockSpec((1, tile_n), lambda i, j, kk: (0, j)),
        ],
        out_specs=pl.BlockSpec((tile_m, tile_n), lambda i, j, kk: (i, j)),
        scratch_shapes=[pltpu.VMEM((tile_m, tile_n), jnp.float32)],
        compiler_params=pltpu.CompilerParams(
            dimension_semantics=("parallel", "parallel", "arbitrary"),
            vmem_limit_bytes=_VMEM_LIMIT),
    )(xp, w, b)
    return out[:m, :n_out]


def _extract_patches(x, k, s, pad):
    """Wrapper-side im2col for the strided conv1 (cheap: Cin=3).  (kh, kw, c) minor order
    to match the prepacked weight reshape."""
    n, h, w, c = x.shape
    ho = (h + 2 * pad - k) // s + 1
    wo = (w + 2 * pad - k) // s + 1
    xp = jnp.pad(x, ((0, 0), (pad, pad), (pad, pad), (0, 0)))
    taps = []
    for kh in range(k):
        for kw in range(k):
            taps.append(xp[:, kh:kh + s * (ho - 1) + 1:s,
                           kw:kw + s * (wo - 1) + 1:s, :])
    patches = jnp.concatenate(taps, axis=-1)            # (n, ho, wo, k*k*c)
    return patches.reshape(n * ho * wo, k * k * c), ho, wo


def conv2d_s1_pallas(x, packed, k, pad, relu, out_dtype=jnp.bfloat16):
    """Stride-1 conv on NHWC with real (unpadded) channel counts; weights prepacked."""
    n, h, w, c = x.shape
    ho = h + 2 * pad - k + 1
    wo = w + 2 * pad - k + 1
    wop = _round_up(wo, 8)                 # lane/sublane friendly compute width
    cout = packed["b"].shape[-1]
    tile_co = 128 if cout % 128 == 0 else cout
    tile_h = max(1, min(8, 128 // wop))    # keep the f32 acc within ~32 vregs

    hp = h + 2 * pad
    wp = max(w + 2 * pad, wop + k - 1)
    xp = jnp.pad(x.astype(jnp.bfloat16),
                 ((0, 0), (pad, hp - h - pad), (pad, wp - w - pad), (0, 0)))

    kernel = functools.partial(_conv_s1_kernel, K=k, Ho=ho, Wop=wop,
                               tile_h=tile_h, relu=relu)
    out = pl.pallas_call(
        kernel,
        out_shape=jax.ShapeDtypeStruct((n, ho * wop, cout), out_dtype),
        grid=(n, cout // tile_co),
        in_specs=[
            pl.BlockSpec((1, hp, wp, c), lambda i, j: (i, 0, 0, 0)),
            pl.BlockSpec((k * k, c, tile_co), lambda i, j: (0, 0, j)),
            pl.BlockSpec((1, tile_co), lambda i, j: (0, j)),
        ],
        out_specs=pl.BlockSpec((1, ho * wop, tile_co), lambda i, j: (i, 0, j)),
        compiler_params=pltpu.CompilerParams(
            dimension_semantics=("parallel", "parallel"),
            vmem_limit_bytes=_VMEM_LIMIT),
    )(xp, packed["w"], packed["b"])
    return out.reshape(n, ho, wop, cout)[:, :, :wo, :]


def maxpool2d_pallas(x, k, stride):
    """MaxPool2d(kernel=k, stride=stride, no padding) on NHWC.  The stride-phase split is
    wrapper-side layout plumbing on a small activation; pads with -inf for safety
    (the padded positions are never read for VALID pooling)."""
    n, h, w, c = x.shape
    s = stride
    ho = (h - k) // s + 1
    wo = (w - k) // s + 1
    h_tot, w_tot = _round_up(h, s), _round_up(w, s)
    xp = jnp.pad(x, ((0, 0), (0, h_tot - h), (0, w_tot - w), (0, 0)),
                 constant_values=-jnp.inf)
    hs, ws = h_tot // s, w_tot // s
    xph = xp.reshape(n, hs, s, ws, s, c)
    xph = jnp.transpose(xph, (0, 2, 4, 1, 3, 5)).reshape(n, s * s, hs, ws, c)
    kernel = functools.partial(_maxpool_kernel, K=k, s=s, Ho=ho, Wo=wo)
    return pl.pallas_call(
        kernel,
        out_shape=jax.ShapeDtypeStruct((n, ho, wo, c), x.dtype),
        grid=(n,),
        in_specs=[pl.BlockSpec((1, s * s, hs, ws, c), lambda i: (i, 0, 0, 0, 0))],
        out_specs=pl.BlockSpec((1, ho, wo, c), lambda i: (i, 0, 0, 0)),
        compiler_params=pltpu.CompilerParams(
            dimension_semantics=("parallel",),
            vmem_limit_bytes=_VMEM_LIMIT),
    )(xph)


# ----------------------------- AlexNetPartial forward ---------------------------

def alexnet_partial_forward(x_nchw, packed, output_layer):
    """Equivalent of AlexNetPartial(layer=output_layer).forward, eval mode.
    `packed` comes from pack_params() (prepacked once, outside the forward)."""
    feat_ops, cls_ops = _truncated_ops(output_layer)
    n = x_nchw.shape[0]
    x = jnp.transpose(x_nchw, (0, 2, 3, 1)).astype(jnp.float32)       # NHWC

    i = 0
    while i < len(feat_ops):
        op = feat_ops[i]
        if op["kind"] == "conv":
            fuse_relu = i + 1 < len(feat_ops) and feat_ops[i + 1]["kind"] == "relu"
            last = (i == len(feat_ops) - 1) and not cls_ops
            out_dtype = jnp.float32 if last else jnp.bfloat16
            p = packed[op["name"]]
            if op["stride"] > 1:
                # conv1: tap-folded matmul (K = 11*11*3), no 128-channel padding.
                patches, ho, wo = _extract_patches(x, op["k"], op["stride"], op["pad"])
                y = linear_pallas(patches, p, relu=fuse_relu, out_dtype=out_dtype)
                x = y.reshape(n, ho, wo, op["cout"])
            else:
                x = conv2d_s1_pallas(x, p, op["k"], op["pad"], relu=fuse_relu,
                                     out_dtype=out_dtype)
            i += 2 if fuse_relu else 1
        elif op["kind"] == "pool":
            x = maxpool2d_pallas(x, op["k"], op["stride"])
            i += 1
        else:   # standalone ReLU (unreached: every features ReLU follows a conv)
            x = jnp.maximum(x, 0).astype(x.dtype)
            i += 1

    if not cls_ops:
        return jnp.transpose(x.astype(jnp.float32), (0, 3, 1, 2))

    # torch: x.view(N, 256*6*6) on the NCHW tensor
    x = jnp.transpose(x, (0, 3, 1, 2)).reshape(n, -1).astype(jnp.float32)
    i = 0
    while i < len(cls_ops):
        op = cls_ops[i]
        if op["kind"] == "linear":
            fuse_relu = i + 1 < len(cls_ops) and cls_ops[i + 1]["kind"] == "relu"
            x = linear_pallas(x, packed[op["name"]], relu=fuse_relu)
            i += 2 if fuse_relu else 1
        else:
            # Dropout: eval-mode identity.
            # TODO(synk): training-mode Dropout (RNG masking) is not implemented.
            if op["kind"] == "relu":
                x = jnp.maximum(x, 0.0)
            i += 1
    return x


# ----------------------------------- reference -----------------------------------

def reference_forward(x_nchw, params, output_layer):
    """Plain-JAX reference with matching bf16 operand/activation rounding."""
    rnd = lambda a: a.astype(jnp.bfloat16).astype(jnp.float32)
    feat_ops, cls_ops = _truncated_ops(output_layer)
    x = rnd(jnp.transpose(x_nchw, (0, 2, 3, 1)).astype(jnp.float32))
    for j, op in enumerate(feat_ops):
        if op["kind"] == "conv":
            wr = rnd(jnp.transpose(params[op["name"]]["w"], (2, 3, 1, 0)))
            p = op["pad"]
            x = lax.conv_general_dilated(
                x, wr, (op["stride"], op["stride"]), ((p, p), (p, p)),
                dimension_numbers=("NHWC", "HWIO", "NHWC"))
            x = x + params[op["name"]]["b"].astype(jnp.float32)
            if not (j == len(feat_ops) - 1 and not cls_ops):
                x = rnd(x)          # Pallas path stores intermediates as bf16
        elif op["kind"] == "relu":
            x = jnp.maximum(x, 0.0)
        else:
            x = lax.reduce_window(x, jnp.array(-jnp.inf, x.dtype), lax.max,
                                  (1, op["k"], op["k"], 1),
                                  (1, op["stride"], op["stride"], 1), "VALID")
    if not cls_ops:
        return jnp.transpose(x, (0, 3, 1, 2))
    x = jnp.transpose(x, (0, 3, 1, 2)).reshape(x.shape[0], -1)
    for op in cls_ops:
        if op["kind"] == "linear":
            wr = rnd(jnp.transpose(params[op["name"]]["w"]))
            x = rnd(x) @ wr + params[op["name"]]["b"].astype(jnp.float32)
        elif op["kind"] == "relu":
            x = jnp.maximum(x, 0.0)
    return x


# ---------------------------------- param init ------------------------------------

def init_conv_params(key):
    """Random conv weights/biases in PyTorch (OIHW) layout.

    TODO(synk): fc6/fc7/fc8 weights (~37M params) are not initialized here to keep the
    demo small; linear_pallas (used by the fc path) is validated standalone in main.
    torch.load-based checkpoint loading (load_model) has no equivalent here.
    """
    params = {}
    convs = [op for op in _FEATURES if op["kind"] == "conv"]
    keys = jax.random.split(key, 2 * len(convs))
    for idx, op in enumerate(convs):
        fan_in = op["cin"] * op["k"] * op["k"]
        params[op["name"]] = {
            "w": jax.random.normal(
                keys[2 * idx], (op["cout"], op["cin"], op["k"], op["k"]),
                jnp.float32) / jnp.sqrt(float(fan_in)),
            "b": 0.05 * jax.random.normal(keys[2 * idx + 1], (op["cout"],),
                                          jnp.float32),
        }
    return params


# -------------------------------------- main --------------------------------------

if __name__ == "__main__":
    key = jax.random.PRNGKey(0)
    k_params, k_x, k_lin = jax.random.split(key, 3)

    params = init_conv_params(k_params)
    packed = pack_params(params)                # weight prep hoisted out of forward
    x = jax.random.normal(k_x, (2, 3, 64, 64), jnp.float32)

    ok = True

    # output_layer='conv1': tap-folded strided 11x11 conv (single matmul), no ReLU.
    out1 = jax.block_until_ready(alexnet_partial_forward(x, packed, "conv1"))
    ref1 = reference_forward(x, params, "conv1")
    assert out1.shape == (2, 64, 15, 15), out1.shape
    ok &= bool(jnp.allclose(out1, ref1, rtol=2e-2, atol=2e-2))

    # output_layer='conv3': conv1 -> ReLU -> pool -> conv2 -> ReLU -> pool -> conv3.
    out3 = jax.block_until_ready(alexnet_partial_forward(x, packed, "conv3"))
    ref3 = reference_forward(x, params, "conv3")
    assert out3.shape == (2, 384, 3, 3), out3.shape
    ok &= bool(jnp.allclose(out3, ref3, rtol=2e-2, atol=2e-2))

    # Standalone check of the fc (linear) kernel with a prepacked weight,
    # covering the M/K/N padding paths.
    kx_, kw_, kb_ = jax.random.split(k_lin, 3)
    xl = jax.random.normal(kx_, (48, 300), jnp.float32)
    wl = jax.random.normal(kw_, (300, 200), jnp.float32) / jnp.sqrt(300.0)
    bl = 0.1 * jax.random.normal(kb_, (200,), jnp.float32)
    pw = _pack_matmul(wl, bl)
    outl = jax.block_until_ready(linear_pallas(xl, pw, relu=True))
    rnd = lambda a: a.astype(jnp.bfloat16).astype(jnp.float32)
    refl = jnp.maximum(rnd(xl) @ rnd(wl) + bl, 0.0)
    ok &= bool(jnp.allclose(outl, refl, rtol=2e-2, atol=2e-2))

    if ok:
        print("KERNEL_OK")
    else:
        raise SystemExit("mismatch vs reference")
</pallas_src>

<mosaic_0001>
module attributes {stable_mosaic.version = 11 : i64} {
  func.func @_linear_kernel(%arg0: i32, %arg1: i32, %arg2: i32, %arg3: memref<256x128xbf16, #tpu.memory_space<vmem>>, %arg4: memref<128x128xbf16, #tpu.memory_space<vmem>>, %arg5: memref<1x128xf32, #tpu.memory_space<vmem>>, %arg6: memref<256x128xf32, #tpu.memory_space<vmem>>, %arg7: memref<256x128xf32, #tpu.memory_space<vmem>>) attributes {dimension_semantics = [#tpu.dimension_semantics<parallel>, #tpu.dimension_semantics<parallel>, #tpu.dimension_semantics<arbitrary>], iteration_bounds = array<i64: 2, 1, 3>, scalar_prefetch = 0 : i64, scratch_operands = 1 : i64, tpu.core_type = #tpu.core_type<tc>, window_params = [{transform_indices = @transform_0, window_bounds = array<i64: 256, 128>}, {transform_indices = @transform_1, window_bounds = array<i64: 128, 128>}, {transform_indices = @transform_2, window_bounds = array<i64: 1, 128>}, {transform_indices = @transform_3, window_bounds = array<i64: 256, 128>}]} {
    %c0_i32 = arith.constant 0 : i32
    %0 = arith.cmpi eq, %arg2, %c0_i32 : i32
    %1 = arith.extui %0 : i1 to i32
    %c0_i32_0 = arith.constant 0 : i32
    %2 = arith.cmpi ne, %1, %c0_i32_0 : i32
    scf.if %2 {
      %cst_9 = arith.constant 0.000000e+00 : f32
      %12 = vector.broadcast %cst_9 : f32 to vector<256x128xf32>
      %c0_10 = arith.constant 0 : index
      %c0_11 = arith.constant 0 : index
      %13 = vector.load %arg7[%c0_10, %c0_11] : memref<256x128xf32, #tpu.memory_space<vmem>>, vector<256x128xf32>
      tpu.vector_store %arg7[%c0_10, %c0_11], %12 {strides = array<i32>} : memref<256x128xf32, #tpu.memory_space<vmem>>, vector<256x128xf32>,
    } else {
    }
    %c0 = arith.constant 0 : index
    %c0_1 = arith.constant 0 : index
    %3 = vector.load %arg7[%c0, %c0_1] : memref<256x128xf32, #tpu.memory_space<vmem>>, vector<256x128xf32>
    %c0_2 = arith.constant 0 : index
    %c0_3 = arith.constant 0 : index
    %4 = vector.load %arg3[%c0_2, %c0_3] : memref<256x128xbf16, #tpu.memory_space<vmem>>, vector<256x128xbf16>
    %c0_4 = arith.constant 0 : index
    %c0_5 = arith.constant 0 : index
    %5 = vector.load %arg4[%c0_4, %c0_5] : memref<128x128xbf16, #tpu.memory_space<vmem>>, vector<128x128xbf16>
    %cst = arith.constant dense<0.000000e+00> : vector<256x128xf32>
    %6 = tpu.matmul %4, %5, %cst {dimension_numbers = #tpu.dot_dimension_numbers<[1], [0], [0], [1], [0, 0, 1, 1], [], []>} : vector<256x128xbf16>, vector<128x128xbf16>, vector<256x128xf32> -> vector<256x128xf32>
    %7 = arith.addf %3, %6 : vector<256x128xf32>
    %c0_6 = arith.constant 0 : index
    %c0_7 = arith.constant 0 : index
    %8 = vector.load %arg7[%c0_6, %c0_7] : memref<256x128xf32, #tpu.memory_space<vmem>>, vector<256x128xf32>
    tpu.vector_store %arg7[%c0_6, %c0_7], %7 {strides = array<i32>} : memref<256x128xf32, #tpu.memory_space<vmem>>, vector<256x128xf32>,
    %c2_i32 = arith.constant 2 : i32
    %9 = arith.cmpi eq, %arg2, %c2_i32 : i32
    %10 = arith.extui %9 : i1 to i32
    %c0_i32_8 = arith.constant 0 : i32
    %11 = arith.cmpi ne, %10, %c0_i32_8 : i32
    scf.if %11 {
      %c0_9 = arith.constant 0 : index
      %c0_10 = arith.constant 0 : index
      %12 = vector.load %arg7[%c0_9, %c0_10] : memref<256x128xf32, #tpu.memory_space<vmem>>, vector<256x128xf32>
      %c0_11 = arith.constant 0 : index
      %c0_12 = arith.constant 0 : index
      %13 = vector.load %arg5[%c0_11, %c0_12] : memref<1x128xf32, #tpu.memory_space<vmem>>, vector<1x128xf32>
      %14 = vector.broadcast %13 : vector<1x128xf32> to vector<256x128xf32>
      %15 = arith.addf %12, %14 : vector<256x128xf32>
      %c0_13 = arith.constant 0 : index
      %c0_14 = arith.constant 0 : index
      %16 = vector.load %arg6[%c0_13, %c0_14] : memref<256x128xf32, #tpu.memory_space<vmem>>, vector<256x128xf32>
      tpu.vector_store %arg6[%c0_13, %c0_14], %15 {strides = array<i32>} : memref<256x128xf32, #tpu.memory_space<vmem>>, vector<256x128xf32>,
    } else {
    }
    return
  }
  func.func @transform_0(%arg0: i32, %arg1: i32, %arg2: i32) -> (i32, i32) {
    %c0_i32 = arith.constant 0 : i32
    return %arg0, %arg2 : i32, i32
  }
  func.func @transform_1(%arg0: i32, %arg1: i32, %arg2: i32) -> (i32, i32) {
    %c0_i32 = arith.constant 0 : i32
    return %arg2, %arg1 : i32, i32
  }
  func.func @transform_2(%arg0: i32, %arg1: i32, %arg2: i32) -> (i32, i32) {
    %c0_i32 = arith.constant 0 : i32
    %c0_i32_0 = arith.constant 0 : i32
    return %c0_i32, %arg1 : i32, i32
  }
  func.func @transform_3(%arg0: i32, %arg1: i32, %arg2: i32) -> (i32, i32) {
    %c0_i32 = arith.constant 0 : i32
    return %arg0, %arg1 : i32, i32
  }
}

</mosaic_0001>

<llo_original>
// kernel: tpu_custom_call.1
$region0: #{tpu_custom_call.1}
  #allocation0 [shape = 'u32[]', space=smem, size = 0x4, offset = 0x4, fixed_abs, tag = 'smem constant byte address 0x4 - core index']
  #allocation1 [shape = 'u32[72,128]{1,0:T(1,128)}', space=vmem, size = 0x9000, scoped, tag = 'internal scratch']
  #allocation2 [shape = 'f32[256,128]{1,0:T(8,128)}', space=vmem, size = 0x20000, scoped, tag = 'scratch operand']
  %s0 = inlined_call_operand.hbm [shape: bf16[512,384], index: 0, kind: input, shape index: {}]
  %s1 = inlined_call_operand.hbm [shape: bf16[384,128], index: 1, kind: input, shape index: {}]
  %s2 = inlined_call_operand.vmem [shape: f32[1,128], index: 2, kind: input, shape index: {}]
  %s3 = inlined_call_operand.hbm [shape: f32[512,128], index: 3, kind: output, shape index: {}]
  %s4 = sld [smem:[#allocation0]]
  $region61: #{tpu_custom_call.1} parent=0
    _
  %s6 = ssub.s32 1, %s4
  %s7 = scalar_select 0, %s6, %s4
  $region1: #{tpu_custom_call.1} parent=0
    #allocation3 [shape = 'u8[131072]{0}', space=vmem, size = 0x20000, scoped, tag = 'input window, operand 0']
    #allocation4 [shape = 's32[2]{0}', space=sflag, size = 0x8, scoped, tag = 'scoped memory for tpu_custom_call.1']
    #allocation5 [shape = 's32[2]{0}', space=sflag, size = 0x8, scoped, tag = 'scoped memory for tpu_custom_call.1']
    #allocation6 [shape = 'u8[65536]{0}', space=vmem, size = 0x10000, scoped, tag = 'input window, operand 1']
    #allocation7 [shape = 's32[2]{0}', space=sflag, size = 0x8, scoped, tag = 'scoped memory for tpu_custom_call.1']
    #allocation8 [shape = 'u8[262144]{0}', space=vmem, size = 0x40000, scoped, tag = 'output window, operand 0']
    %8 = vsyncpa [#allocation4], 0
    %s9 = scalar_lea.sflag [#allocation4], 1
    %10 = vsyncpa %s9, 0
    %11 = vsyncpa [#allocation7], 0
    %s12 = scalar_lea.sflag [#allocation7], 1
    %13 = vsyncpa %s12, 0
    %14 = vsyncpa [#allocation5], 0
    %s15 = scalar_lea.sflag [#allocation5], 1
    %16 = vsyncpa %s15, 0
    loop: start=0, step=1, limit=8
    $region2: #{tpu_custom_call.1} parent=1 // loop_pre_header
      _
    $region3: #{tpu_custom_call.1} parent=1 // loop_header
      %s18 = sphi 0, %s22
      %p19 = scmp.ge.s32.totalorder %s18, 8
      %s25 = sphi 0, %s44
      %s26 = sphi 0, %s40
      %s27 = sphi 0, %s36
      %s28 = sphi 0, %s25
      %s29 = sphi 0, %s26
      %s30 = sphi 0, %s27
      %s31 = sphi 0, %s28
      %s32 = sphi 0, %s29
      %s33 = sphi 0, %s30
      %s49 = sphi 0, %s51
      %s52 = sphi 0, %s49
      %s53 = sphi 0, %s52
      %s69 = sphi 0, %s53
      %s77 = sphi 0, %s79
      %s80 = sphi 0, %s77
      %s81 = sphi 0, %s80
      %s97 = sphi 0, %s81
      %s103 = sphi 0, %s105
      %s106 = sphi 0, %s103
      %s107 = sphi 0, %s106
      %s123 = sphi 0, %s107
      %s131 = sphi 0, %s133
      %s134 = sphi 0, %s131
      %s135 = sphi 0, %s134
      %s151 = sphi 0, %s135
    $region4: #{tpu_custom_call.1} parent=1 // loop_header_branch
      %21 = sbr.rel (%p19) target = $region8
    $region5: #{tpu_custom_call.1} parent=1 // loop_body
      %s23 = ssub.s32 %s18, 1
      %s24 = ssub.s32 %s18, 2
      %s34 = sadd.s32 1, %s27
      %p35 = scmp.ge.s32.totalorder %s34, 3
      %s36 = scalar_select %p35, 0, %s34
      %s37 = sadd.s32 1, %s26
      %s38 = scalar_select %p35, %s37, %s26
      %p39 = scmp.ge.s32.totalorder %s38, 1
      %s40 = scalar_select %p39, 0, %s38
      %s41 = sadd.s32 1, %s25
      %s42 = scalar_select %p39, %s41, %s25
      %p43 = scmp.ge.s32.totalorder %s42, 2
      %s44 = scalar_select %p43, 0, %s42
      %s45 = ssub.s32 %s25, %s44
      %s46 = ssub.s32 %s27, %s36
      %s47 = sor.u32 %s45, %s46
      %p48 = scmp.eq.s32.totalorder %s47, 0
      %s50 = sadd.s32 %s49, 1
      %s51 = scalar_select %p48, %s49, %s50
      %p54 = pneg %p48
      %p55 = scmp.eq.s32.totalorder %s18, 5
      %p56 = por %p54, %p55
      %p57 = scmp.ne.s32.totalorder %s49, %s52
      %p58 = scmp.eq.s32.totalorder %s18, 0
      %p59 = por %p57, %p58
      %p60 = scmp.ne.s32.totalorder %s49, %s52
      %p61 = scmp.eq.s32.totalorder %s23, 5
      %p62 = por %p60, %p61
      %p63 = scmp.ne.s32.totalorder %s52, %s53
      %p64 = scmp.eq.s32.totalorder %s23, 0
      %p65 = por %p63, %p64
      %p66 = scmp.ne.s32.totalorder %s52, %s53
      %p67 = scmp.eq.s32.totalorder %s24, 5
      %p68 = por %p66, %p67
      %p70 = scmp.ne.s32.totalorder %s53, %s69
      %p71 = scmp.eq.s32.totalorder %s24, 0
      %p72 = por %p70, %p71
      %s73 = ssub.s32 %s27, %s36
      %s74 = ssub.s32 %s26, %s40
      %s75 = sor.u32 %s73, %s74
      %p76 = scmp.eq.s32.totalorder %s75, 0
      %s78 = sadd.s32 %s77, 1
      %s79 = scalar_select %p76, %s77, %s78
      %p82 = pneg %p76
      %p83 = scmp.eq.s32.totalorder %s18, 5
      %p84 = por %p82, %p83
      %p85 = scmp.ne.s32.totalorder %s77, %s80
      %p86 = scmp.eq.s32.totalorder %s18, 0
      %p87 = por %p85, %p86
      %p88 = scmp.ne.s32.totalorder %s77, %s80
      %p89 = scmp.eq.s32.totalorder %s23, 5
      %p90 = por %p88, %p89
      %p91 = scmp.ne.s32.totalorder %s80, %s81
      %p92 = scmp.eq.s32.totalorder %s23, 0
      %p93 = por %p91, %p92
      %p94 = scmp.ne.s32.totalorder %s80, %s81
      %p95 = scmp.eq.s32.totalorder %s24, 5
      %p96 = por %p94, %p95
      %p98 = scmp.ne.s32.totalorder %s81, %s97
      %p99 = scmp.eq.s32.totalorder %s24, 0
      %p100 = por %p98, %p99
      %s101 = ssub.s32 %s26, %s40
      %p102 = scmp.eq.s32.totalorder %s101, 0
      %s104 = sadd.s32 %s103, 1
      %s105 = scalar_select %p102, %s103, %s104
      %p108 = pneg %p102
      %p109 = scmp.eq.s32.totalorder %s18, 5
      %p110 = por %p108, %p109
      %p111 = scmp.ne.s32.totalorder %s103, %s106
      %p112 = scmp.eq.s32.totalorder %s18, 0
      %p113 = por %p111, %p112
      %p114 = scmp.ne.s32.totalorder %s103, %s106
      %p115 = scmp.eq.s32.totalorder %s23, 5
      %p116 = por %p114, %p115
      %p117 = scmp.ne.s32.totalorder %s106, %s107
      %p118 = scmp.eq.s32.totalorder %s23, 0
      %p119 = por %p117, %p118
      %p120 = scmp.ne.s32.totalorder %s106, %s107
      %p121 = scmp.eq.s32.totalorder %s24, 5
      %p122 = por %p120, %p121
      %p124 = scmp.ne.s32.totalorder %s107, %s123
      %p125 = scmp.eq.s32.totalorder %s24, 0
      %p126 = por %p124, %p125
      %s127 = ssub.s32 %s25, %s44
      %s128 = ssub.s32 %s26, %s40
      %s129 = sor.u32 %s127, %s128
      %p130 = scmp.eq.s32.totalorder %s129, 0
      %s132 = sadd.s32 %s131, 1
      %s133 = scalar_select %p130, %s131, %s132
      %p136 = pneg %p130
      %p137 = scmp.eq.s32.totalorder %s18, 5
      %p138 = por %p136, %p137
      %p139 = scmp.ne.s32.totalorder %s131, %s134
      %p140 = scmp.eq.s32.totalorder %s18, 0
      %p141 = por %p139, %p140
      %p142 = scmp.ne.s32.totalorder %s131, %s134
      %p143 = scmp.eq.s32.totalorder %s23, 5
      %p144 = por %p142, %p143
      %p145 = scmp.ne.s32.totalorder %s134, %s135
      %p146 = scmp.eq.s32.totalorder %s23, 0
      %p147 = por %p145, %p146
      %p148 = scmp.ne.s32.totalorder %s134, %s135
      %p149 = scmp.eq.s32.totalorder %s24, 5
      %p150 = por %p148, %p149
      %p152 = scmp.ne.s32.totalorder %s135, %s151
      %p153 = scmp.eq.s32.totalorder %s24, 0
      %p154 = por %p152, %p153
      %p155 = scmp.le.s32.totalorder 1, %s18
      %p156 = scmp.lt.s32.totalorder %s18, 7
      %p157 = pnand %p155, %p156
      %p158 = pneg %p157
      // Predicated region
      $region9: #{tpu_custom_call.1} parent=5 // pred_check
        _
      $region10: #{tpu_custom_call.1} parent=5 // pred_check_branch
        %160 = sbr.rel (%p157) target = $region12
      $region11: #{tpu_custom_call.1} parent=5 // pred_region
        %s161 = ssub.s32 %s18, 1
        // Predicated region
        $region13: #{tpu_custom_call.1} parent=11 // pred_check
          %p162 = pneg %p119
        $region14: #{tpu_custom_call.1} parent=11 // pred_check_branch
          %164 = sbr.rel (%p162) target = $region16
        $region15: #{tpu_custom_call.1} parent=11 // pred_region
          %p165 = scmp.lt.s32.totalorder %s29, 0
          %s166 = scalar_select %p165, %s29, 0
          %s167 = scalar_lea.vmem %s2, %s166
        $region16: #{tpu_custom_call.1} parent=11 // pred_fallthru
          _
      $region12: #{tpu_custom_call.1} parent=5 // pred_fallthru
        _
      %p168 = scmp.lt.s32.totalorder %s18, 6
      // Predicated region
      $region17: #{tpu_custom_call.1} parent=5 // pred_check
        %p169 = pneg %p168
      $region18: #{tpu_custom_call.1} parent=5 // pred_check_branch
        %171 = sbr.rel (%p169) target = $region20
      $region19: #{tpu_custom_call.1} parent=5 // pred_region
        // Predicated region
        $region21: #{tpu_custom_call.1} parent=19 // pred_check
          %p172 = pneg %p59
        $region22: #{tpu_custom_call.1} parent=19 // pred_check_branch
          %174 = sbr.rel (%p172) target = $region24
        $region23: #{tpu_custom_call.1} parent=19 // pred_region
          %s175 = sand.u32 %s49, 1
          %s176 = scalar_lea.sflag [#allocation4], %s175
          %s177 = sand.u32 %s49, 1
          %s178 = smul.addr %s177, 128
          %s179 = scalar_lea.vmem [#allocation3], %s178
          %s180 = smul.u32 32, %s25
          %182 = vsyncadd %s176, 0
          %s183 = smul.addr %s180, 3
          %s184 = sadd.s32 %s27, %s183
          %s185 = smul.addr %s184, 4
          %s186 = scalar_lea.hbm %s0, %s185
          %s187 = sshll.u32 %s186, 4
          %s188 = int_to_ptr.hbm [resolvable:$true] %s187
          %s189 = sshll.u32 %s179, 4
          %s190 = int_to_ptr.vmem [resolvable:$true] %s189
          %195 = dma.hbm_to_vmem [thread:$0]  %s188, 2048, %s190, %s176, 192, 64, 4
        $region24: #{tpu_custom_call.1} parent=19 // pred_fallthru
          _
        // Predicated region
        $region25: #{tpu_custom_call.1} parent=19 // pred_check
          %p196 = pneg %p87
        $region26: #{tpu_custom_call.1} parent=19 // pred_check_branch
          %198 = sbr.rel (%p196) target = $region28
        $region27: #{tpu_custom_call.1} parent=19 // pred_region
          %s199 = sand.u32 %s77, 1
          %s200 = scalar_lea.sflag [#allocation7], %s199
          %s201 = sand.u32 %s77, 1
          %s202 = smul.addr %s201, 64
          %s203 = scalar_lea.vmem [#allocation6], %s202
          %s204 = smul.u32 16, %s27
          %206 = vsyncadd %s200, 0
          %s207 = sadd.s32 %s26, %s204
          %s208 = smul.addr %s207, 4
          %s209 = scalar_lea.hbm %s1, %s208
          %s210 = sshll.u32 %s209, 4
          %s211 = int_to_ptr.hbm [resolvable:$true] %s210
          %s212 = sshll.u32 %s203, 4
          %s213 = int_to_ptr.vmem [resolvable:$true] %s212
          %218 = dma.hbm_to_vmem [thread:$0]  %s211, 1024, %s213, %s200, 64, 64, 4
        $region28: #{tpu_custom_call.1} parent=19 // pred_fallthru
          _
      $region20: #{tpu_custom_call.1} parent=5 // pred_fallthru
        _
      %p219 = scmp.le.s32.totalorder 1, %s18
      %p220 = scmp.lt.s32.totalorder %s18, 7
      %p221 = pnand %p219, %p220
      %p222 = pneg %p221
      // Predicated region
      $region29: #{tpu_custom_call.1} parent=5 // pred_check
        _
      $region30: #{tpu_custom_call.1} parent=5 // pred_check_branch
        %224 = sbr.rel (%p221) target = $region32
      $region31: #{tpu_custom_call.1} parent=5 // pred_region
        %s225 = ssub.s32 %s18, 1
        %s226 = sand.u32 %s52, 1
        %s227 = scalar_lea.sflag [#allocation4], %s226
        %s228 = sand.u32 %s52, 1
        %s229 = smul.addr %s228, 128
        %s230 = scalar_lea.vmem [#allocation3], %s229
        // Predicated region
        $region33: #{tpu_custom_call.1} parent=31 // pred_check
          %p231 = pneg %p65
        $region34: #{tpu_custom_call.1} parent=31 // pred_check_branch
          %233 = sbr.rel (%p231) target = $region36
        $region35: #{tpu_custom_call.1} parent=31 // pred_region
          %235 = dma.done %s227, 2048
        $region36: #{tpu_custom_call.1} parent=31 // pred_fallthru
          _
        %s236 = sand.u32 %s80, 1
        %s237 = scalar_lea.sflag [#allocation7], %s236
        %s238 = sand.u32 %s80, 1
        %s239 = smul.addr %s238, 64
        %s240 = scalar_lea.vmem [#allocation6], %s239
        // Predicated region
        $region37: #{tpu_custom_call.1} parent=31 // pred_check
          %p241 = pneg %p93
        $region38: #{tpu_custom_call.1} parent=31 // pred_check_branch
          %243 = sbr.rel (%p241) target = $region40
        $region39: #{tpu_custom_call.1} parent=31 // pred_region
          %245 = dma.done %s237, 1024
        $region40: #{tpu_custom_call.1} parent=31 // pred_fallthru
          _
        %s246 = sand.u32 %s52, 1
        %s247 = scalar_lea.sflag [#allocation4], %s246
        %s248 = sand.u32 %s52, 1
        %s249 = smul.addr %s248, 128
        %s250 = scalar_lea.vmem [#allocation3], %s249
        %p251 = pneg %p65
        %p252 = pneg %p62
        %s253 = sand.u32 %s80, 1
        %s254 = scalar_lea.sflag [#allocation7], %s253
        %s255 = sand.u32 %s80, 1
        %s256 = smul.addr %s255, 64
        %s257 = scalar_lea.vmem [#allocation6], %s256
        %p258 = pneg %p93
        %p259 = pneg %p90
        %p260 = scmp.lt.s32.totalorder %s29, 0
        %s261 = scalar_select %p260, %s29, 0
        %s262 = scalar_lea.vmem %s2, %s261
        %p263 = pneg %p119
        %p264 = pneg %p116
        %p265 = pneg %p147
        %p266 = pneg %p144
        %s267 = sand.u32 %s134, 1
        %s268 = scalar_lea.sflag [#allocation5], %s267
        %s269 = sand.u32 %s134, 1
        %s270 = smul.addr %s269, 256
        %s271 = scalar_lea.vmem [#allocation8], %s270
        %s272 = smul.u32 32, %s28
        %s273 = smul.u32 16, %s30
        %p274 = scmp.lt.s32.totalorder %s29, 0
        %s275 = scalar_select %p274, %s29, 0
        %s276 = scalar_lea.vmem %s2, %s275
        %s277 = smul.u32 32, %s28
        %p278 = scmp.eq.s32.totalorder %s30, 0
        // Predicated region
        $region41: #{tpu_custom_call.1} parent=31 // pred_check
          %p279 = pneg %p278
        $region42: #{tpu_custom_call.1} parent=31 // pred_check_branch
          %281 = sbr.rel (%p279) target = $region44
        $region43: #{tpu_custom_call.1} parent=31 // pred_region
          %282 = vst [vmem:[#allocation2] sm:$0xff] 0.0
          %283 = vst [vmem:[#allocation2 + $0x8] sm:$0xff] 0.0
          %284 = vst [vmem:[#allocation2 + $0x10] sm:$0xff] 0.0
          %285 = vst [vmem:[#allocation2 + $0x18] sm:$0xff] 0.0
          %286 = vst [vmem:[#allocation2 + $0x20] sm:$0xff] 0.0
          %287 = vst [vmem:[#allocation2 + $0x28] sm:$0xff] 0.0
          %288 = vst [vmem:[#allocation2 + $0x30] sm:$0xff] 0.0
          %289 = vst [vmem:[#allocation2 + $0x38] sm:$0xff] 0.0
          %290 = vst [vmem:[#allocation2 + $0x40] sm:$0xff] 0.0
          %291 = vst [vmem:[#allocation2 + $0x48] sm:$0xff] 0.0
          %292 = vst [vmem:[#allocation2 + $0x50] sm:$0xff] 0.0
          %293 = vst [vmem:[#allocation2 + $0x58] sm:$0xff] 0.0
          %294 = vst [vmem:[#allocation2 + $0x60] sm:$0xff] 0.0
          %295 = vst [vmem:[#allocation2 + $0x68] sm:$0xff] 0.0
          %296 = vst [vmem:[#allocation2 + $0x70] sm:$0xff] 0.0
          %297 = vst [vmem:[#allocation2 + $0x78] sm:$0xff] 0.0
          %298 = vst [vmem:[#allocation2 + $0x80] sm:$0xff] 0.0
          %299 = vst [vmem:[#allocation2 + $0x88] sm:$0xff] 0.0
          %300 = vst [vmem:[#allocation2 + $0x90] sm:$0xff] 0.0
          %301 = vst [vmem:[#allocation2 + $0x98] sm:$0xff] 0.0
          %302 = vst [vmem:[#allocation2 + $0xa0] sm:$0xff] 0.0
          %303 = vst [vmem:[#allocation2 + $0xa8] sm:$0xff] 0.0
          %304 = vst [vmem:[#allocation2 + $0xb0] sm:$0xff] 0.0
          %305 = vst [vmem:[#allocation2 + $0xb8] sm:$0xff] 0.0
          %306 = vst [vmem:[#allocation2 + $0xc0] sm:$0xff] 0.0
          %307 = vst [vmem:[#allocation2 + $0xc8] sm:$0xff] 0.0
          %308 = vst [vmem:[#allocation2 + $0xd0] sm:$0xff] 0.0
          %309 = vst [vmem:[#allocation2 + $0xd8] sm:$0xff] 0.0
          %310 = vst [vmem:[#allocation2 + $0xe0] sm:$0xff] 0.0
          %311 = vst [vmem:[#allocation2 + $0xe8] sm:$0xff] 0.0
          %312 = vst [vmem:[#allocation2 + $0xf0] sm:$0xff] 0.0
          %313 = vst [vmem:[#allocation2 + $0xf8] sm:$0xff] 0.0
        $region44: #{tpu_custom_call.1} parent=31 // pred_fallthru
          _
        %v314 = vld [vmem:[#allocation2] sm:$0xff]
        %v315 = vld [vmem:[#allocation2 + $0x8] sm:$0xff]
        %v316 = vld [vmem:[#allocation2 + $0x10] sm:$0xff]
        %v317 = vld [vmem:[#allocation2 + $0x18] sm:$0xff]
        %v318 = vld [vmem:[#allocation2 + $0x20] sm:$0xff]
        %v319 = vld [vmem:[#allocation2 + $0x28] sm:$0xff]
        %v320 = vld [vmem:[#allocation2 + $0x30] sm:$0xff]
        %v321 = vld [vmem:[#allocation2 + $0x38] sm:$0xff]
        %v322 = vld [vmem:[#allocation2 + $0x40] sm:$0xff]
        %v323 = vld [vmem:[#allocation2 + $0x48] sm:$0xff]
        %v324 = vld [vmem:[#allocation2 + $0x50] sm:$0xff]
        %v325 = vld [vmem:[#allocation2 + $0x58] sm:$0xff]
        %v326 = vld [vmem:[#allocation2 + $0x60] sm:$0xff]
        %v327 = vld [vmem:[#allocation2 + $0x68] sm:$0xff]
        %v328 = vld [vmem:[#allocation2 + $0x70] sm:$0xff]
        %v329 = vld [vmem:[#allocation2 + $0x78] sm:$0xff]
        %v330 = vld [vmem:[#allocation2 + $0x80] sm:$0xff]
        %v331 = vld [vmem:[#allocation2 + $0x88] sm:$0xff]
        %v332 = vld [vmem:[#allocation2 + $0x90] sm:$0xff]
        %v333 = vld [vmem:[#allocation2 + $0x98] sm:$0xff]
        %v334 = vld [vmem:[#allocation2 + $0xa0] sm:$0xff]
        %v335 = vld [vmem:[#allocation2 + $0xa8] sm:$0xff]
        %v336 = vld [vmem:[#allocation2 + $0xb0] sm:$0xff]
        %v337 = vld [vmem:[#allocation2 + $0xb8] sm:$0xff]
        %v338 = vld [vmem:[#allocation2 + $0xc0] sm:$0xff]
        %v339 = vld [vmem:[#allocation2 + $0xc8] sm:$0xff]
        %v340 = vld [vmem:[#allocation2 + $0xd0] sm:$0xff]
        %v341 = vld [vmem:[#allocation2 + $0xd8] sm:$0xff]
        %v342 = vld [vmem:[#allocation2 + $0xe0] sm:$0xff]
        %v343 = vld [vmem:[#allocation2 + $0xe8] sm:$0xff]
        %v344 = vld [vmem:[#allocation2 + $0xf0] sm:$0xff]
        %v345 = vld [vmem:[#allocation2 + $0xf8] sm:$0xff]
        %v346 = vld [vmem:[%s230] sm:$0xf]
        %v347 = vld [vmem:[%s230 + $0x4] sm:$0xf]
        %v348 = vld [vmem:[%s230 + $0x8] sm:$0xf]
        %v349 = vld [vmem:[%s230 + $0xc] sm:$0xf]
        %v350 = vld [vmem:[%s230 + $0x10] sm:$0xf]
        %v351 = vld [vmem:[%s230 + $0x14] sm:$0xf]
        %v352 = vld [vmem:[%s230 + $0x18] sm:$0xf]
        %v353 = vld [vmem:[%s230 + $0x1c] sm:$0xf]
        %v354 = vld [vmem:[%s230 + $0x20] sm:$0xf]
        %v355 = vld [vmem:[%s230 + $0x24] sm:$0xf]
        %v356 = vld [vmem:[%s230 + $0x28] sm:$0xf]
        %v357 = vld [vmem:[%s230 + $0x2c] sm:$0xf]
        %v358 = vld [vmem:[%s230 + $0x30] sm:$0xf]
        %v359 = vld [vmem:[%s230 + $0x34] sm:$0xf]
        %v360 = vld [vmem:[%s230 + $0x38] sm:$0xf]
        %v361 = vld [vmem:[%s230 + $0x3c] sm:$0xf]
        %v362 = vld [vmem:[%s230 + $0x40] sm:$0xf]
        %v363 = vld [vmem:[%s230 + $0x44] sm:$0xf]
        %v364 = vld [vmem:[%s230 + $0x48] sm:$0xf]
        %v365 = vld [vmem:[%s230 + $0x4c] sm:$0xf]
        %v366 = vld [vmem:[%s230 + $0x50] sm:$0xf]
        %v367 = vld [vmem:[%s230 + $0x54] sm:$0xf]
        %v368 = vld [vmem:[%s230 + $0x58] sm:$0xf]
        %v369 = vld [vmem:[%s230 + $0x5c] sm:$0xf]
        %v370 = vld [vmem:[%s230 + $0x60] sm:$0xf]
        %v371 = vld [vmem:[%s230 + $0x64] sm:$0xf]
        %v372 = vld [vmem:[%s230 + $0x68] sm:$0xf]
        %v373 = vld [vmem:[%s230 + $0x6c] sm:$0xf]
        %v374 = vld [vmem:[%s230 + $0x70] sm:$0xf]
        %v375 = vld [vmem:[%s230 + $0x74] sm:$0xf]
        %v376 = vld [vmem:[%s230 + $0x78] sm:$0xf]
        %v377 = vld [vmem:[%s230 + $0x7c] sm:$0xf]
        %v378 = vld [vmem:[%s240] sm:$0xf]
        %v379 = vld [vmem:[%s240 + $0x4] sm:$0xf]
        %v380 = vld [vmem:[%s240 + $0x8] sm:$0xf]
        %v381 = vld [vmem:[%s240 + $0xc] sm:$0xf]
        %v382 = vld [vmem:[%s240 + $0x10] sm:$0xf]
        %v383 = vld [vmem:[%s240 + $0x14] sm:$0xf]
        %v384 = vld [vmem:[%s240 + $0x18] sm:$0xf]
        %v385 = vld [vmem:[%s240 + $0x1c] sm:$0xf]
        %v386 = vld [vmem:[%s240 + $0x20] sm:$0xf]
        %v387 = vld [vmem:[%s240 + $0x24] sm:$0xf]
        %v388 = vld [vmem:[%s240 + $0x28] sm:$0xf]
        %v389 = vld [vmem:[%s240 + $0x2c] sm:$0xf]
        %v390 = vld [vmem:[%s240 + $0x30] sm:$0xf]
        %v391 = vld [vmem:[%s240 + $0x34] sm:$0xf]
        %v392 = vld [vmem:[%s240 + $0x38] sm:$0xf]
        %v393 = vld [vmem:[%s240 + $0x3c] sm:$0xf]
        %v426 = vunpack.c.l.b16 %v346
        %v427 = vunpack.c.l.b16 %v347
        %v428 = vunpack.c.l.b16 %v348
        %v429 = vunpack.c.l.b16 %v349
        %v430 = vunpack.c.l.b16 %v350
        %v431 = vunpack.c.l.b16 %v351
        %v432 = vunpack.c.l.b16 %v352
        %v433 = vunpack.c.l.b16 %v353
        %v434 = vunpack.c.l.b16 %v354
        %v435 = vunpack.c.l.b16 %v355
        %v436 = vunpack.c.l.b16 %v356
        %v437 = vunpack.c.l.b16 %v357
        %v438 = vunpack.c.l.b16 %v358
        %v439 = vunpack.c.l.b16 %v359
        %v440 = vunpack.c.l.b16 %v360
        %v441 = vunpack.c.l.b16 %v361
        %v442 = vunpack.c.l.b16 %v362
        %v443 = vunpack.c.l.b16 %v363
        %v444 = vunpack.c.l.b16 %v364
        %v445 = vunpack.c.l.b16 %v365
        %v446 = vunpack.c.l.b16 %v366
        %v447 = vunpack.c.l.b16 %v367
        %v448 = vunpack.c.l.b16 %v368
        %v449 = vunpack.c.l.b16 %v369
        %v450 = vunpack.c.l.b16 %v370
        %v451 = vunpack.c.l.b16 %v371
        %v452 = vunpack.c.l.b16 %v372
        %v453 = vunpack.c.l.b16 %v373
        %v454 = vunpack.c.l.b16 %v374
        %v455 = vunpack.c.l.b16 %v375
        %v456 = vunpack.c.l.b16 %v376
        %v457 = vunpack.c.l.b16 %v377
        %v458 = vpack.c.b16 %v427, %v426
        %v459 = vpack.c.b16 %v429, %v428
        %v460 = vpack.c.b16 %v431, %v430
        %v461 = vpack.c.b16 %v433, %v432
        %v462 = vpack.c.b16 %v435, %v434
        %v463 = vpack.c.b16 %v437, %v436
        %v464 = vpack.c.b16 %v439, %v438
        %v465 = vpack.c.b16 %v441, %v440
        %v466 = vpack.c.b16 %v443, %v442
        %v467 = vpack.c.b16 %v445, %v444
        %v468 = vpack.c.b16 %v447, %v446
        %v469 = vpack.c.b16 %v449, %v448
        %v470 = vpack.c.b16 %v451, %v450
        %v471 = vpack.c.b16 %v453, %v452
        %v472 = vpack.c.b16 %v455, %v454
        %v473 = vpack.c.b16 %v457, %v456
        %v506 = vunpack.c.l.b16 %v378
        %v507 = vunpack.c.l.b16 %v379
        %v508 = vunpack.c.l.b16 %v380
        %v509 = vunpack.c.l.b16 %v381
        %v510 = vunpack.c.l.b16 %v382
        %v511 = vunpack.c.l.b16 %v383
        %v512 = vunpack.c.l.b16 %v384
        %v513 = vunpack.c.l.b16 %v385
        %v514 = vunpack.c.l.b16 %v386
        %v515 = vunpack.c.l.b16 %v387
        %v516 = vunpack.c.l.b16 %v388
        %v517 = vunpack.c.l.b16 %v389
        %v518 = vunpack.c.l.b16 %v390
        %v519 = vunpack.c.l.b16 %v391
        %v520 = vunpack.c.l.b16 %v392
        %v521 = vunpack.c.l.b16 %v393
        %v522 = vpack.c.b16 %v507, %v506
        %v523 = vpack.c.b16 %v509, %v508
        %v524 = vpack.c.b16 %v511, %v510
        %v525 = vpack.c.b16 %v513, %v512
        %v526 = vpack.c.b16 %v515, %v514
        %v527 = vpack.c.b16 %v517, %v516
        %v528 = vpack.c.b16 %v519, %v518
        %v529 = vpack.c.b16 %v521, %v520
        %538 = vmatpush.bf16.msra.mxu0 %v529
        %539 = vmatpush.bf16.msra.mxu0 %v528
        %540 = vmatpush.bf16.msra.mxu0 %v527
        %541 = vmatpush.bf16.msra.mxu0 %v526
        %542 = vmatpush.bf16.msra.mxu0 %v525
        %543 = vmatpush.bf16.msra.mxu0 %v524
        %544 = vmatpush.bf16.msra.mxu0 %v523
        %545 = vmatpush.bf16.msra.mxu0 %v522
        %546 = vmatmul.bf16.gmra.mxu0 %v458
        %v547 = vpop.f32.mrf.mxu0
        %v548 = vadd.f32 0.0, %v547
        %v549 = vpop.f32.mrf.mxu0
        %v550 = vadd.f32 0.0, %v549
        %551 = vmatmul.bf16.gmra.mxu0 %v459
        %v552 = vpop.f32.mrf.mxu0
        %v553 = vadd.f32 0.0, %v552
        %v554 = vpop.f32.mrf.mxu0
        %v555 = vadd.f32 0.0, %v554
        %556 = vmatmul.bf16.gmra.mxu0 %v460
        %v557 = vpop.f32.mrf.mxu0
        %v558 = vadd.f32 0.0, %v557
        %v559 = vpop.f32.mrf.mxu0
        %v560 = vadd.f32 0.0, %v559
        %561 = vmatmul.bf16.gmra.mxu0 %v461
        %v562 = vpop.f32.mrf.mxu0
        %v563 = vadd.f32 0.0, %v562
        %v564 = vpop.f32.mrf.mxu0
        %v565 = vadd.f32 0.0, %v564
        %566 = vmatmul.bf16.gmra.mxu0 %v462
        %v567 = vpop.f32.mrf.mxu0
        %v568 = vadd.f32 0.0, %v567
        %v569 = vpop.f32.mrf.mxu0
        %v570 = vadd.f32 0.0, %v569
        %571 = vmatmul.bf16.gmra.mxu0 %v463
        %v572 = vpop.f32.mrf.mxu0
        %v573 = vadd.f32 0.0, %v572
        %v574 = vpop.f32.mrf.mxu0
        %v575 = vadd.f32 0.0, %v574
        %576 = vmatmul.bf16.gmra.mxu0 %v464
        %v577 = vpop.f32.mrf.mxu0
        %v578 = vadd.f32 0.0, %v577
        %v579 = vpop.f32.mrf.mxu0
        %v580 = vadd.f32 0.0, %v579
        %581 = vmatmul.bf16.gmra.mxu0 %v465
        %v582 = vpop.f32.mrf.mxu0
        %v583 = vadd.f32 0.0, %v582
        %v584 = vpop.f32.mrf.mxu0
        %v585 = vadd.f32 0.0, %v584
        %586 = vmatmul.bf16.gmra.mxu0 %v466
        %v587 = vpop.f32.mrf.mxu0
        %v588 = vadd.f32 0.0, %v587
        %v589 = vpop.f32.mrf.mxu0
        %v590 = vadd.f32 0.0, %v589
        %591 = vmatmul.bf16.gmra.mxu0 %v467
        %v592 = vpop.f32.mrf.mxu0
        %v593 = vadd.f32 0.0, %v592
        %v594 = vpop.f32.mrf.mxu0
        %v595 = vadd.f32 0.0, %v594
        %596 = vmatmul.bf16.gmra.mxu0 %v468
        %v597 = vpop.f32.mrf.mxu0
        %v598 = vadd.f32 0.0, %v597
        %v599 = vpop.f32.mrf.mxu0
        %v600 = vadd.f32 0.0, %v599
        %601 = vmatmul.bf16.gmra.mxu0 %v469
        %v602 = vpop.f32.mrf.mxu0
        %v603 = vadd.f32 0.0, %v602
        %v604 = vpop.f32.mrf.mxu0
        %v605 = vadd.f32 0.0, %v604
        %606 = vmatmul.bf16.gmra.mxu0 %v470
        %v607 = vpop.f32.mrf.mxu0
        %v608 = vadd.f32 0.0, %v607
        %v609 = vpop.f32.mrf.mxu0
        %v610 = vadd.f32 0.0, %v609
        %611 = vmatmul.bf16.gmra.mxu0 %v471
        %v612 = vpop.f32.mrf.mxu0
        %v613 = vadd.f32 0.0, %v612
        %v614 = vpop.f32.mrf.mxu0
        %v615 = vadd.f32 0.0, %v614
        %616 = vmatmul.bf16.gmra.mxu0 %v472
        %v617 = vpop.f32.mrf.mxu0
        %v618 = vadd.f32 0.0, %v617
        %v619 = vpop.f32.mrf.mxu0
        %v620 = vadd.f32 0.0, %v619
        %621 = vmatmul.bf16.gmra.mxu0 %v473
        %v622 = vpop.f32.mrf.mxu0
        %v623 = vadd.f32 0.0, %v622
        %v624 = vpop.f32.mrf.mxu0
        %v625 = vadd.f32 0.0, %v624
        %626 = vdwg.mxu0
        %v627 = vadd.f32 %v314, %v548
        %v628 = vadd.f32 %v315, %v550
        %v629 = vadd.f32 %v316, %v553
        %v630 = vadd.f32 %v317, %v555
        %v631 = vadd.f32 %v318, %v558
        %v632 = vadd.f32 %v319, %v560
        %v633 = vadd.f32 %v320, %v563
        %v634 = vadd.f32 %v321, %v565
        %v635 = vadd.f32 %v322, %v568
        %v636 = vadd.f32 %v323, %v570
        %v637 = vadd.f32 %v324, %v573
        %v638 = vadd.f32 %v325, %v575
        %v639 = vadd.f32 %v326, %v578
        %v640 = vadd.f32 %v327, %v580
        %v641 = vadd.f32 %v328, %v583
        %v642 = vadd.f32 %v329, %v585
        %v643 = vadd.f32 %v330, %v588
        %v644 = vadd.f32 %v331, %v590
        %v645 = vadd.f32 %v332, %v593
        %v646 = vadd.f32 %v333, %v595
        %v647 = vadd.f32 %v334, %v598
        %v648 = vadd.f32 %v335, %v600
        %v649 = vadd.f32 %v336, %v603
        %v650 = vadd.f32 %v337, %v605
        %v651 = vadd.f32 %v338, %v608
        %v652 = vadd.f32 %v339, %v610
        %v653 = vadd.f32 %v340, %v613
        %v654 = vadd.f32 %v341, %v615
        %v655 = vadd.f32 %v342, %v618
        %v656 = vadd.f32 %v343, %v620
        %v657 = vadd.f32 %v344, %v623
        %v658 = vadd.f32 %v345, %v625
        %659 = vst [vmem:[#allocation2] sm:$0xff] %v627
        %660 = vst [vmem:[#allocation2 + $0x8] sm:$0xff] %v628
        %661 = vst [vmem:[#allocation2 + $0x10] sm:$0xff] %v629
        %662 = vst [vmem:[#allocation2 + $0x18] sm:$0xff] %v630
        %663 = vst [vmem:[#allocation2 + $0x20] sm:$0xff] %v631
        %664 = vst [vmem:[#allocation2 + $0x28] sm:$0xff] %v632
        %665 = vst [vmem:[#allocation2 + $0x30] sm:$0xff] %v633
        %666 = vst [vmem:[#allocation2 + $0x38] sm:$0xff] %v634
        %667 = vst [vmem:[#allocation2 + $0x40] sm:$0xff] %v635
        %668 = vst [vmem:[#allocation2 + $0x48] sm:$0xff] %v636
        %669 = vst [vmem:[#allocation2 + $0x50] sm:$0xff] %v637
        %670 = vst [vmem:[#allocation2 + $0x58] sm:$0xff] %v638
        %671 = vst [vmem:[#allocation2 + $0x60] sm:$0xff] %v639
        %672 = vst [vmem:[#allocation2 + $0x68] sm:$0xff] %v640
        %673 = vst [vmem:[#allocation2 + $0x70] sm:$0xff] %v641
        %674 = vst [vmem:[#allocation2 + $0x78] sm:$0xff] %v642
        %675 = vst [vmem:[#allocation2 + $0x80] sm:$0xff] %v643
        %676 = vst [vmem:[#allocation2 + $0x88] sm:$0xff] %v644
        %677 = vst [vmem:[#allocation2 + $0x90] sm:$0xff] %v645
        %678 = vst [vmem:[#allocation2 + $0x98] sm:$0xff] %v646
        %679 = vst [vmem:[#allocation2 + $0xa0] sm:$0xff] %v647
        %680 = vst [vmem:[#allocation2 + $0xa8] sm:$0xff] %v648
        %681 = vst [vmem:[#allocation2 + $0xb0] sm:$0xff] %v649
        %682 = vst [vmem:[#allocation2 + $0xb8] sm:$0xff] %v650
        %683 = vst [vmem:[#allocation2 + $0xc0] sm:$0xff] %v651
        %684 = vst [vmem:[#allocation2 + $0xc8] sm:$0xff] %v652
        %685 = vst [vmem:[#allocation2 + $0xd0] sm:$0xff] %v653
        %686 = vst [vmem:[#allocation2 + $0xd8] sm:$0xff] %v654
        %687 = vst [vmem:[#allocation2 + $0xe0] sm:$0xff] %v655
        %688 = vst [vmem:[#allocation2 + $0xe8] sm:$0xff] %v656
        %689 = vst [vmem:[#allocation2 + $0xf0] sm:$0xff] %v657
        %690 = vst [vmem:[#allocation2 + $0xf8] sm:$0xff] %v658
        %p691 = scmp.eq.s32.totalorder %s30, 2
        // Predicated region
        $region45: #{tpu_custom_call.1} parent=31 // pred_check
          %p692 = pneg %p691
        $region46: #{tpu_custom_call.1} parent=31 // pred_check_branch
          %694 = sbr.rel (%p692) target = $region48
        $region47: #{tpu_custom_call.1} parent=31 // pred_region
          %v695 = vld [vmem:[#allocation2] sm:$0xff]
          %v696 = vld [vmem:[#allocation2 + $0x8] sm:$0xff]
          %v697 = vld [vmem:[#allocation2 + $0x10] sm:$0xff]
          %v698 = vld [vmem:[#allocation2 + $0x18] sm:$0xff]
          %v699 = vld [vmem:[#allocation2 + $0x20] sm:$0xff]
          %v700 = vld [vmem:[#allocation2 + $0x28] sm:$0xff]
          %v701 = vld [vmem:[#allocation2 + $0x30] sm:$0xff]
          %v702 = vld [vmem:[#allocation2 + $0x38] sm:$0xff]
          %v703 = vld [vmem:[#allocation2 + $0x40] sm:$0xff]
          %v704 = vld [vmem:[#allocation2 + $0x48] sm:$0xff]
          %v705 = vld [vmem:[#allocation2 + $0x50] sm:$0xff]
          %v706 = vld [vmem:[#allocation2 + $0x58] sm:$0xff]
          %v707 = vld [vmem:[#allocation2 + $0x60] sm:$0xff]
          %v708 = vld [vmem:[#allocation2 + $0x68] sm:$0xff]
          %v709 = vld [vmem:[#allocation2 + $0x70] sm:$0xff]
          %v710 = vld [vmem:[#allocation2 + $0x78] sm:$0xff]
          %v711 = vld [vmem:[#allocation2 + $0x80] sm:$0xff]
          %v712 = vld [vmem:[#allocation2 + $0x88] sm:$0xff]
          %v713 = vld [vmem:[#allocation2 + $0x90] sm:$0xff]
          %v714 = vld [vmem:[#allocation2 + $0x98] sm:$0xff]
          %v715 = vld [vmem:[#allocation2 + $0xa0] sm:$0xff]
          %v716 = vld [vmem:[#allocation2 + $0xa8] sm:$0xff]
          %v717 = vld [vmem:[#allocation2 + $0xb0] sm:$0xff]
          %v718 = vld [vmem:[#allocation2 + $0xb8] sm:$0xff]
          %v719 = vld [vmem:[#allocation2 + $0xc0] sm:$0xff]
          %v720 = vld [vmem:[#allocation2 + $0xc8] sm:$0xff]
          %v721 = vld [vmem:[#allocation2 + $0xd0] sm:$0xff]
          %v722 = vld [vmem:[#allocation2 + $0xd8] sm:$0xff]
          %v723 = vld [vmem:[#allocation2 + $0xe0] sm:$0xff]
          %v724 = vld [vmem:[#allocation2 + $0xe8] sm:$0xff]
          %v725 = vld [vmem:[#allocation2 + $0xf0] sm:$0xff]
          %v726 = vld [vmem:[#allocation2 + $0xf8] sm:$0xff]
          %v727 = vld [vmem:[%s276] sm:$0x1]
          %v729 = vperm.slane %v727, 0
          %v731 = vadd.f32 %v695, %v729
          %v732 = vadd.f32 %v696, %v729
          %v733 = vadd.f32 %v697, %v729
          %v734 = vadd.f32 %v698, %v729
          %v735 = vadd.f32 %v699, %v729
          %v736 = vadd.f32 %v700, %v729
          %v737 = vadd.f32 %v701, %v729
          %v738 = vadd.f32 %v702, %v729
          %v739 = vadd.f32 %v703, %v729
          %v740 = vadd.f32 %v704, %v729
          %v741 = vadd.f32 %v705, %v729
          %v742 = vadd.f32 %v706, %v729
          %v743 = vadd.f32 %v707, %v729
          %v744 = vadd.f32 %v708, %v729
          %v745 = vadd.f32 %v709, %v729
          %v746 = vadd.f32 %v710, %v729
          %v747 = vadd.f32 %v711, %v729
          %v748 = vadd.f32 %v712, %v729
          %v749 = vadd.f32 %v713, %v729
          %v750 = vadd.f32 %v714, %v729
          %v751 = vadd.f32 %v715, %v729
          %v752 = vadd.f32 %v716, %v729
          %v753 = vadd.f32 %v717, %v729
          %v754 = vadd.f32 %v718, %v729
          %v755 = vadd.f32 %v719, %v729
          %v756 = vadd.f32 %v720, %v729
          %v757 = vadd.f32 %v721, %v729
          %v758 = vadd.f32 %v722, %v729
          %v759 = vadd.f32 %v723, %v729
          %v760 = vadd.f32 %v724, %v729
          %v761 = vadd.f32 %v725, %v729
          %v762 = vadd.f32 %v726, %v729
          %763 = vst [vmem:[%s271] sm:$0xff] %v731
          %764 = vst [vmem:[%s271 + $0x8] sm:$0xff] %v732
          %765 = vst [vmem:[%s271 + $0x10] sm:$0xff] %v733
          %766 = vst [vmem:[%s271 + $0x18] sm:$0xff] %v734
          %767 = vst [vmem:[%s271 + $0x20] sm:$0xff] %v735
          %768 = vst [vmem:[%s271 + $0x28] sm:$0xff] %v736
          %769 = vst [vmem:[%s271 + $0x30] sm:$0xff] %v737
          %770 = vst [vmem:[%s271 + $0x38] sm:$0xff] %v738
          %771 = vst [vmem:[%s271 + $0x40] sm:$0xff] %v739
          %772 = vst [vmem:[%s271 + $0x48] sm:$0xff] %v740
          %773 = vst [vmem:[%s271 + $0x50] sm:$0xff] %v741
          %774 = vst [vmem:[%s271 + $0x58] sm:$0xff] %v742
          %775 = vst [vmem:[%s271 + $0x60] sm:$0xff] %v743
          %776 = vst [vmem:[%s271 + $0x68] sm:$0xff] %v744
          %777 = vst [vmem:[%s271 + $0x70] sm:$0xff] %v745
          %778 = vst [vmem:[%s271 + $0x78] sm:$0xff] %v746
          %779 = vst [vmem:[%s271 + $0x80] sm:$0xff] %v747
          %780 = vst [vmem:[%s271 + $0x88] sm:$0xff] %v748
          %781 = vst [vmem:[%s271 + $0x90] sm:$0xff] %v749
          %782 = vst [vmem:[%s271 + $0x98] sm:$0xff] %v750
          %783 = vst [vmem:[%s271 + $0xa0] sm:$0xff] %v751
          %784 = vst [vmem:[%s271 + $0xa8] sm:$0xff] %v752
          %785 = vst [vmem:[%s271 + $0xb0] sm:$0xff] %v753
          %786 = vst [vmem:[%s271 + $0xb8] sm:$0xff] %v754
          %787 = vst [vmem:[%s271 + $0xc0] sm:$0xff] %v755
          %788 = vst [vmem:[%s271 + $0xc8] sm:$0xff] %v756
          %789 = vst [vmem:[%s271 + $0xd0] sm:$0xff] %v757
          %790 = vst [vmem:[%s271 + $0xd8] sm:$0xff] %v758
          %791 = vst [vmem:[%s271 + $0xe0] sm:$0xff] %v759
          %792 = vst [vmem:[%s271 + $0xe8] sm:$0xff] %v760
          %793 = vst [vmem:[%s271 + $0xf0] sm:$0xff] %v761
          %794 = vst [vmem:[%s271 + $0xf8] sm:$0xff] %v762
        $region48: #{tpu_custom_call.1} parent=31 // pred_fallthru
          _
        %s795 = sand.u32 %s134, 1
        %s796 = scalar_lea.sflag [#allocation5], %s795
        %s797 = sand.u32 %s134, 1
        %s798 = smul.addr %s797, 256
        %s799 = scalar_lea.vmem [#allocation8], %s798
        // Predicated region
        $region49: #{tpu_custom_call.1} parent=31 // pred_check
          %p800 = pneg %p144
        $region50: #{tpu_custom_call.1} parent=31 // pred_check_branch
          %802 = sbr.rel (%p800) target = $region52
        $region51: #{tpu_custom_call.1} parent=31 // pred_region
          %s803 = smul.u32 32, %s28
          %805 = vsyncadd %s796, 0
          %s806 = sadd.s32 %s29, %s803
          %s807 = smul.addr %s806, 8
          %s808 = scalar_lea.hbm %s3, %s807
          %s809 = sshll.u32 %s799, 4
          %s810 = int_to_ptr.vmem [resolvable:$true] %s809
          %s811 = sshll.u32 %s808, 4
          %s812 = int_to_ptr.hbm [resolvable:$true] %s811
          %817 = dma.vmem_to_hbm [thread:$0]  %s810, 4096, %s812, %s796, 128, 128, 8
        $region52: #{tpu_custom_call.1} parent=31 // pred_fallthru
          _
      $region32: #{tpu_custom_call.1} parent=5 // pred_fallthru
        _
      %p818 = scmp.le.s32.totalorder 2, %s18
      // Predicated region
      $region53: #{tpu_custom_call.1} parent=5 // pred_check
        %p819 = pneg %p818
      $region54: #{tpu_custom_call.1} parent=5 // pred_check_branch
        %821 = sbr.rel (%p819) target = $region56
      $region55: #{tpu_custom_call.1} parent=5 // pred_region
        %s822 = ssub.s32 %s18, 2
        // Predicated region
        $region57: #{tpu_custom_call.1} parent=55 // pred_check
          %p823 = pneg %p150
        $region58: #{tpu_custom_call.1} parent=55 // pred_check_branch
          %825 = sbr.rel (%p823) target = $region60
        $region59: #{tpu_custom_call.1} parent=55 // pred_region
          %s826 = sand.u32 %s135, 1
          %s827 = scalar_lea.sflag [#allocation5], %s826
          %s828 = sand.u32 %s135, 1
          %s829 = smul.addr %s828, 256
          %s830 = scalar_lea.vmem [#allocation8], %s829
          %832 = dma.done %s827, 4096
        $region60: #{tpu_custom_call.1} parent=55 // pred_fallthru
          _
      $region56: #{tpu_custom_call.1} parent=5 // pred_fallthru
        _
    $region6: #{tpu_custom_call.1} parent=1 // loop_footer
      %s22 = sadd.s32 1, %s18
    $region7: #{tpu_custom_call.1} parent=1 // loop_footer_branch
      %17 = sbr.rel target = $region3
    $region8: #{tpu_custom_call.1} parent=1 // loop_exit
      _
    %833 = vsyncpa [#allocation4], 1
    %s834 = scalar_lea.sflag [#allocation4], 1
    %835 = vsyncpa %s834, 1
    %836 = vsyncpa [#allocation7], 1
    %s837 = scalar_lea.sflag [#allocation7], 1
    %838 = vsyncpa %s837, 1
    %839 = vsyncpa [#allocation5], 1
    %s840 = scalar_lea.sflag [#allocation5], 1
    %841 = vsyncpa %s840, 1

</llo_original>
